<compile_context>
chip_gen: v7x
topology: tpu7x:2x2x1
jax: 0.10.0
libtpu: 0.0.40
codegen_flags: <defaults>
</compile_context>

<pallas_src>
import jax
import jax.numpy as jnp
from jax.experimental import pallas as pl
from jax.experimental.pallas import tpu as pltpu


def _round_up(n, m):
    return (n + m - 1) // m * m


def sae_kernel(x_ref, wenc_ref, benc_ref, wdec_ref, bdec_ref,
               dec_ref, enc_ref, acc_ref, xc_ref):
    """One (batch-tile, hidden-tile) step of the SAE forward pass.

    x_ref   : (bm, Dp)   input batch tile
    wenc_ref: (Dp, th)   encoder weight tile (torch encoder.weight.T slice)
    benc_ref: (1, th)    encoder bias tile
    wdec_ref: (th, Dp)   decoder weight tile (torch decoder.weight.T slice)
    bdec_ref: (1, Dp)    decoder bias
    dec_ref : (bm, Dp)   decoded output tile (resident across hidden tiles)
    enc_ref : (bm, th)   encoded output tile
    acc_ref : (bm, Dp)   f32 decode accumulator (scratch)
    xc_ref  : (bm, Dp)   cached centered input, x - b_dec (scratch)
    """
    h = pl.program_id(1)
    n_h = pl.num_programs(1)

    # First hidden tile of this batch tile: seed the decode accumulator with
    # the decoder bias (fuses the final bias add) and compute the centered
    # input once (hoisted out of the hidden loop).
    @pl.when(h == 0)
    def _():
        bdec_f32 = bdec_ref[...].astype(jnp.float32)
        acc_ref[...] = jnp.broadcast_to(bdec_f32, acc_ref.shape)
        xc_ref[...] = (x_ref[...].astype(jnp.float32)
                       - bdec_f32).astype(xc_ref.dtype)

    # encode: relu((x - b_dec) @ W_enc + b_enc)   -- this hidden tile only.
    pre = jnp.dot(xc_ref[...], wenc_ref[...],
                  preferred_element_type=jnp.float32)
    pre = pre + benc_ref[...].astype(jnp.float32)
    encoded = jnp.maximum(pre, 0.0)
    enc_ref[...] = encoded.astype(enc_ref.dtype)

    # decode: accumulate encoded @ W_dec in f32 across hidden tiles.
    acc_ref[...] += jnp.dot(encoded.astype(wdec_ref.dtype), wdec_ref[...],
                            preferred_element_type=jnp.float32)

    # Last hidden tile: bias is already folded in, just cast + store.
    @pl.when(h == n_h - 1)
    def _():
        dec_ref[...] = acc_ref[...].astype(dec_ref.dtype)


def sparse_autoencoder_forward(x, w_enc, b_enc, w_dec, b_dec, *,
                               bm=256, th=512):
    """x: (B, D).  w_enc: (D, H) [= torch encoder.weight.T], b_enc: (H,),
    w_dec: (H, D) [= torch decoder.weight.T], b_dec: (D,).
    Returns (decoded (B, D), encoded (B, H))."""
    B, D = x.shape
    Dw, H = w_enc.shape
    assert Dw == D and w_dec.shape == (H, D)
    assert b_enc.shape == (H,) and b_dec.shape == (D,)

    # Lane-dense padding: last dims to multiples of 128, batch to the tile.
    D_p = _round_up(D, 128)
    H_p = _round_up(H, 128)

    # Clamp tiles to the (padded) problem, keep TPU-friendly alignment.
    bm = _round_up(min(bm, _round_up(B, 8)), 8)
    th = _round_up(min(th, H_p), 128)
    B_p = _round_up(B, bm)
    n_h = (H_p + th - 1) // th
    H_p = n_h * th
    n_b = B_p // bm

    # Zero padding is exactly neutral for this forward pass.
    x_p = jnp.pad(x, ((0, B_p - B), (0, D_p - D)))
    wenc_p = jnp.pad(w_enc, ((0, D_p - D), (0, H_p - H)))
    benc_p = jnp.pad(b_enc, (0, H_p - H)).reshape(1, H_p)
    wdec_p = jnp.pad(w_dec, ((0, H_p - H), (0, D_p - D)))
    bdec_p = jnp.pad(b_dec, (0, D_p - D)).reshape(1, D_p)

    out_dtype = x.dtype

    # VMEM budget from the chosen tiles (double-buffered inputs/outputs) with
    # ~50% headroom; clamped so small problems still get a sane scoped limit.
    def esize(a):
        return jnp.dtype(a.dtype).itemsize

    est = 2 * (bm * D_p * esize(x_p)            # x tile
               + D_p * th * esize(wenc_p)       # encoder weight tile
               + th * esize(benc_p)             # encoder bias tile
               + th * D_p * esize(wdec_p)       # decoder weight tile
               + D_p * esize(bdec_p)            # decoder bias
               + bm * D_p * esize(x_p)          # decoded output tile
               + bm * th * esize(x_p))          # encoded output tile
    est += bm * D_p * 4 + bm * D_p * esize(x_p)  # scratch: acc (f32) + xc
    vmem_limit = int(min(max(est * 3 // 2, 32 * 1024 * 1024),
                         100 * 1024 * 1024))

    dec_p, enc_p = pl.pallas_call(
        sae_kernel,
        out_shape=(
            jax.ShapeDtypeStruct((B_p, D_p), out_dtype),   # decoded
            jax.ShapeDtypeStruct((B_p, H_p), out_dtype),   # encoded
        ),
        grid_spec=pltpu.PrefetchScalarGridSpec(
            num_scalar_prefetch=0,
            grid=(n_b, n_h),
            in_specs=[
                pl.BlockSpec((bm, D_p), lambda i, h: (i, 0)),   # x
                pl.BlockSpec((D_p, th), lambda i, h: (0, h)),   # W_enc tile
                pl.BlockSpec((1, th),   lambda i, h: (0, h)),   # b_enc tile
                pl.BlockSpec((th, D_p), lambda i, h: (h, 0)),   # W_dec tile
                pl.BlockSpec((1, D_p),  lambda i, h: (0, 0)),   # b_dec
            ],
            out_specs=[
                pl.BlockSpec((bm, D_p), lambda i, h: (i, 0)),   # decoded (resident over h)
                pl.BlockSpec((bm, th),  lambda i, h: (i, h)),   # encoded
            ],
            scratch_shapes=[
                pltpu.VMEM((bm, D_p), jnp.float32),   # decode accumulator
                pltpu.VMEM((bm, D_p), x.dtype),       # centered input cache
            ],
        ),
        compiler_params=pltpu.CompilerParams(
            dimension_semantics=("parallel", "arbitrary"),
            vmem_limit_bytes=vmem_limit,
        ),
    )(x_p, wenc_p, benc_p, wdec_p, bdec_p)

    return dec_p[:B, :D], enc_p[:B, :H]


def _reference(x, w_enc, b_enc, w_dec, b_dec):
    """Pure-JAX reference matching the PyTorch forward exactly."""
    xc = x - b_dec[None, :]
    enc = jnp.maximum(xc @ w_enc + b_enc[None, :], 0.0)
    dec = enc @ w_dec + b_dec[None, :]
    return dec, enc


# TODO(synk): normalize_decoder_weights() is a training-time utility (weight
# re-normalization), not part of forward(); it is not implemented here.

if __name__ == "__main__":
    # Small, module-consistent shapes (batch=16, input_size=32, hidden=64).
    B, D, H = 16, 32, 64
    key = jax.random.PRNGKey(0)
    kx, ke, kbe, kd, kbd = jax.random.split(key, 5)

    x = jax.random.normal(kx, (B, D), dtype=jnp.float32)

    # Deterministic parameter init (uniform, roughly matching nn.Linear scale).
    lim_e = 1.0 / (D ** 0.5)
    lim_d = 1.0 / (H ** 0.5)
    w_enc = jax.random.uniform(ke, (D, H), jnp.float32, -lim_e, lim_e)   # encoder.weight.T
    b_enc = jax.random.uniform(kbe, (H,), jnp.float32, -lim_e, lim_e)
    w_dec = jax.random.uniform(kd, (H, D), jnp.float32, -lim_d, lim_d)   # decoder.weight.T
    b_dec = jax.random.uniform(kbd, (D,), jnp.float32, -lim_d, lim_d)

    decoded, encoded = sparse_autoencoder_forward(x, w_enc, b_enc, w_dec, b_dec)
    jax.block_until_ready((decoded, encoded))

    dec_ref, enc_ref = _reference(x, w_enc, b_enc, w_dec, b_dec)
    assert decoded.shape == (B, D) and encoded.shape == (B, H)
    assert jnp.allclose(decoded, dec_ref, atol=1e-5, rtol=1e-5)
    assert jnp.allclose(encoded, enc_ref, atol=1e-5, rtol=1e-5)

    print("KERNEL_OK")
</pallas_src>

<mosaic_0001>
module attributes {stable_mosaic.version = 11 : i64} {
  func.func @sae_kernel(%arg0: i32, %arg1: i32, %arg2: memref<16x128xf32, #tpu.memory_space<vmem>>, %arg3: memref<128x128xf32, #tpu.memory_space<vmem>>, %arg4: memref<1x128xf32, #tpu.memory_space<vmem>>, %arg5: memref<128x128xf32, #tpu.memory_space<vmem>>, %arg6: memref<1x128xf32, #tpu.memory_space<vmem>>, %arg7: memref<16x128xf32, #tpu.memory_space<vmem>>, %arg8: memref<16x128xf32, #tpu.memory_space<vmem>>, %arg9: memref<16x128xf32, #tpu.memory_space<vmem>>, %arg10: memref<16x128xf32, #tpu.memory_space<vmem>>) attributes {dimension_semantics = [#tpu.dimension_semantics<parallel>, #tpu.dimension_semantics<arbitrary>], iteration_bounds = array<i64: 1, 1>, scalar_prefetch = 0 : i64, scratch_operands = 2 : i64, tpu.core_type = #tpu.core_type<tc>, window_params = [{transform_indices = @transform_0, window_bounds = array<i64: 16, 128>}, {transform_indices = @transform_1, window_bounds = array<i64: 128, 128>}, {transform_indices = @transform_2, window_bounds = array<i64: 1, 128>}, {transform_indices = @transform_3, window_bounds = array<i64: 128, 128>}, {pipeline_mode = #tpu.pipeline_mode<synchronous>, transform_indices = @transform_4, window_bounds = array<i64: 1, 128>}, {transform_indices = @transform_5, window_bounds = array<i64: 16, 128>}, {transform_indices = @transform_6, window_bounds = array<i64: 16, 128>}]} {
    %c0_i32 = arith.constant 0 : i32
    %0 = arith.cmpi eq, %arg1, %c0_i32 : i32
    %1 = arith.extui %0 : i1 to i32
    %c0_i32_0 = arith.constant 0 : i32
    %2 = arith.cmpi ne, %1, %c0_i32_0 : i32
    scf.if %2 {
      %c0_18 = arith.constant 0 : index
      %c0_19 = arith.constant 0 : index
      %20 = vector.load %arg6[%c0_18, %c0_19] : memref<1x128xf32, #tpu.memory_space<vmem>>, vector<1x128xf32>
      %21 = vector.shape_cast %20 : vector<1x128xf32> to vector<1x128xf32>
      %22 = vector.broadcast %21 : vector<1x128xf32> to vector<16x128xf32>
      %c0_20 = arith.constant 0 : index
      %c0_21 = arith.constant 0 : index
      %23 = vector.load %arg9[%c0_20, %c0_21] : memref<16x128xf32, #tpu.memory_space<vmem>>, vector<16x128xf32>
      tpu.vector_store %arg9[%c0_20, %c0_21], %22 {strides = array<i32>} : memref<16x128xf32, #tpu.memory_space<vmem>>, vector<16x128xf32>,
      %c0_22 = arith.constant 0 : index
      %c0_23 = arith.constant 0 : index
      %24 = vector.load %arg2[%c0_22, %c0_23] : memref<16x128xf32, #tpu.memory_space<vmem>>, vector<16x128xf32>
      %25 = vector.broadcast %20 : vector<1x128xf32> to vector<16x128xf32>
      %26 = arith.subf %24, %25 : vector<16x128xf32>
      %c0_24 = arith.constant 0 : index
      %c0_25 = arith.constant 0 : index
      %27 = vector.load %arg10[%c0_24, %c0_25] : memref<16x128xf32, #tpu.memory_space<vmem>>, vector<16x128xf32>
      tpu.vector_store %arg10[%c0_24, %c0_25], %26 {strides = array<i32>} : memref<16x128xf32, #tpu.memory_space<vmem>>, vector<16x128xf32>,
    } else {
    }
    %c0 = arith.constant 0 : index
    %c0_1 = arith.constant 0 : index
    %3 = vector.load %arg10[%c0, %c0_1] : memref<16x128xf32, #tpu.memory_space<vmem>>, vector<16x128xf32>
    %c0_2 = arith.constant 0 : index
    %c0_3 = arith.constant 0 : index
    %4 = vector.load %arg3[%c0_2, %c0_3] : memref<128x128xf32, #tpu.memory_space<vmem>>, vector<128x128xf32>
    %cst = arith.constant dense<0.000000e+00> : vector<16x128xf32>
    %5 = tpu.matmul %3, %4, %cst {dimension_numbers = #tpu.dot_dimension_numbers<[1], [0], [0], [1], [0, 0, 1, 1], [], []>} : vector<16x128xf32>, vector<128x128xf32>, vector<16x128xf32> -> vector<16x128xf32>
    %c0_4 = arith.constant 0 : index
    %c0_5 = arith.constant 0 : index
    %6 = vector.load %arg4[%c0_4, %c0_5] : memref<1x128xf32, #tpu.memory_space<vmem>>, vector<1x128xf32>
    %7 = vector.broadcast %6 : vector<1x128xf32> to vector<16x128xf32>
    %8 = arith.addf %5, %7 : vector<16x128xf32>
    %cst_6 = arith.constant 0.000000e+00 : f32
    %9 = vector.broadcast %cst_6 : f32 to vector<16x128xf32>
    %10 = arith.maximumf %8, %9 : vector<16x128xf32>
    %c0_7 = arith.constant 0 : index
    %c0_8 = arith.constant 0 : index
    %11 = vector.load %arg8[%c0_7, %c0_8] : memref<16x128xf32, #tpu.memory_space<vmem>>, vector<16x128xf32>
    tpu.vector_store %arg8[%c0_7, %c0_8], %10 {strides = array<i32>} : memref<16x128xf32, #tpu.memory_space<vmem>>, vector<16x128xf32>,
    %c0_9 = arith.constant 0 : index
    %c0_10 = arith.constant 0 : index
    %12 = vector.load %arg9[%c0_9, %c0_10] : memref<16x128xf32, #tpu.memory_space<vmem>>, vector<16x128xf32>
    %c0_11 = arith.constant 0 : index
    %c0_12 = arith.constant 0 : index
    %13 = vector.load %arg5[%c0_11, %c0_12] : memref<128x128xf32, #tpu.memory_space<vmem>>, vector<128x128xf32>
    %cst_13 = arith.constant dense<0.000000e+00> : vector<16x128xf32>
    %14 = tpu.matmul %10, %13, %cst_13 {dimension_numbers = #tpu.dot_dimension_numbers<[1], [0], [0], [1], [0, 0, 1, 1], [], []>} : vector<16x128xf32>, vector<128x128xf32>, vector<16x128xf32> -> vector<16x128xf32>
    %15 = arith.addf %12, %14 : vector<16x128xf32>
    %c0_14 = arith.constant 0 : index
    %c0_15 = arith.constant 0 : index
    %16 = vector.load %arg9[%c0_14, %c0_15] : memref<16x128xf32, #tpu.memory_space<vmem>>, vector<16x128xf32>
    tpu.vector_store %arg9[%c0_14, %c0_15], %15 {strides = array<i32>} : memref<16x128xf32, #tpu.memory_space<vmem>>, vector<16x128xf32>,
    %c0_i32_16 = arith.constant 0 : i32
    %17 = arith.cmpi eq, %arg1, %c0_i32_16 : i32
    %18 = arith.extui %17 : i1 to i32
    %c0_i32_17 = arith.constant 0 : i32
    %19 = arith.cmpi ne, %18, %c0_i32_17 : i32
    scf.if %19 {
      %c0_18 = arith.constant 0 : index
      %c0_19 = arith.constant 0 : index
      %20 = vector.load %arg9[%c0_18, %c0_19] : memref<16x128xf32, #tpu.memory_space<vmem>>, vector<16x128xf32>
      %c0_20 = arith.constant 0 : index
      %c0_21 = arith.constant 0 : index
      %21 = vector.load %arg7[%c0_20, %c0_21] : memref<16x128xf32, #tpu.memory_space<vmem>>, vector<16x128xf32>
      tpu.vector_store %arg7[%c0_20, %c0_21], %20 {strides = array<i32>} : memref<16x128xf32, #tpu.memory_space<vmem>>, vector<16x128xf32>,
    } else {
    }
    return
  }
  func.func @transform_0(%arg0: i32, %arg1: i32) -> (i32, i32) {
    %c0_i32 = arith.constant 0 : i32
    %c0_i32_0 = arith.constant 0 : i32
    return %arg0, %c0_i32 : i32, i32
  }
  func.func @transform_1(%arg0: i32, %arg1: i32) -> (i32, i32) {
    %c0_i32 = arith.constant 0 : i32
    %c0_i32_0 = arith.constant 0 : i32
    return %c0_i32, %arg1 : i32, i32
  }
  func.func @transform_2(%arg0: i32, %arg1: i32) -> (i32, i32) {
    %c0_i32 = arith.constant 0 : i32
    %c0_i32_0 = arith.constant 0 : i32
    return %c0_i32, %arg1 : i32, i32
  }
  func.func @transform_3(%arg0: i32, %arg1: i32) -> (i32, i32) {
    %c0_i32 = arith.constant 0 : i32
    %c0_i32_0 = arith.constant 0 : i32
    return %arg1, %c0_i32 : i32, i32
  }
  func.func @transform_4(%arg0: i32, %arg1: i32) -> (i32, i32) {
    %c0_i32 = arith.constant 0 : i32
    %c0_i32_0 = arith.constant 0 : i32
    %c0_i32_1 = arith.constant 0 : i32
    return %c0_i32, %c0_i32_0 : i32, i32
  }
  func.func @transform_5(%arg0: i32, %arg1: i32) -> (i32, i32) {
    %c0_i32 = arith.constant 0 : i32
    %c0_i32_0 = arith.constant 0 : i32
    return %arg0, %c0_i32 : i32, i32
  }
  func.func @transform_6(%arg0: i32, %arg1: i32) -> (i32, i32) {
    %c0_i32 = arith.constant 0 : i32
    return %arg0, %arg1 : i32, i32
  }
}

</mosaic_0001>

<llo_original>
// kernel: tpu_custom_call.1
$region0: #{tpu_custom_call.1}
  #allocation0 [shape = 'u32[]', space=smem, size = 0x4, offset = 0x4, fixed_abs, tag = 'smem constant byte address 0x4 - core index']
  #allocation1 [shape = 'u32[144,128]{1,0:T(1,128)}', space=vmem, size = 0x12000, scoped, tag = 'internal scratch']
  #allocation2 [shape = 'f32[16,128]{1,0:T(8,128)}', space=vmem, size = 0x2000, scoped, tag = 'scratch operand']
  #allocation3 [shape = 'f32[16,128]{1,0:T(8,128)}', space=vmem, size = 0x2000, scoped, tag = 'scratch operand']
  %s0 = inlined_call_operand.hbm [shape: f32[16,128], index: 0, kind: input, shape index: {}]
  %s1 = inlined_call_operand.hbm [shape: f32[128,128], index: 1, kind: input, shape index: {}]
  %s2 = inlined_call_operand.vmem [shape: f32[1,128], index: 2, kind: input, shape index: {}]
  %s3 = inlined_call_operand.hbm [shape: f32[128,128], index: 3, kind: input, shape index: {}]
  %s4 = inlined_call_operand.vmem [shape: f32[1,128], index: 4, kind: input, shape index: {}]
  %s5 = inlined_call_operand.hbm [shape: f32[16,128], index: 5, kind: output, shape index: {0}]
  %s6 = inlined_call_operand.hbm [shape: f32[16,128], index: 6, kind: output, shape index: {1}]
  %7 = xla_tuple %s5, %s6
  %s8 = sld [smem:[#allocation0]]
  $region58: #{tpu_custom_call.1} parent=0
    _
  %s10 = ssub.s32 1, %s8
  %s11 = scalar_select 0, %s10, %s8
  $region1: #{tpu_custom_call.1} parent=0
    #allocation4 [shape = 'u8[8192]{0}', space=vmem, size = 0x2000, scoped, tag = 'input window, operand 0, single buffered']
    #allocation5 [shape = 's32[1]{0}', space=sflag, size = 0x4, scoped, tag = 'scoped memory for tpu_custom_call.1']
    #allocation6 [shape = 's32[1]{0}', space=sflag, size = 0x4, scoped, tag = 'scoped memory for tpu_custom_call.1']
    #allocation7 [shape = 'u8[65536]{0}', space=vmem, size = 0x10000, scoped, tag = 'input window, operand 1, single buffered']
    #allocation8 [shape = 's32[1]{0}', space=sflag, size = 0x4, scoped, tag = 'scoped memory for tpu_custom_call.1']
    #allocation9 [shape = 'u8[65536]{0}', space=vmem, size = 0x10000, scoped, tag = 'input window, operand 3, single buffered']
    #allocation10 [shape = 'u8[8192]{0}', space=vmem, size = 0x2000, scoped, tag = 'output window, operand 0, single buffered']
    #allocation11 [shape = 'u8[8192]{0}', space=vmem, size = 0x2000, scoped, tag = 'output window, operand 1, single buffered']
    #allocation12 [shape = 's32[1]{0}', space=sflag, size = 0x4, scoped, tag = 'scoped memory for tpu_custom_call.1']
    %12 = vsyncpa [#allocation5], 0
    %13 = vsyncpa [#allocation8], 0
    %14 = vsyncpa [#allocation6], 0
    %15 = vsyncpa [#allocation12], 0
    // Predicated region
    $region2: #{tpu_custom_call.1} parent=1 // pred_check
      _
    $region3: #{tpu_custom_call.1} parent=1 // pred_check_branch
      %17 = sbr.rel (0) target = $region5
    $region4: #{tpu_custom_call.1} parent=1 // pred_region
      %s19 = ssub.s32 256, 256
      %20 = vsyncadd [#allocation5], %s19
      %s21 = sshll.u32 [#allocation4], 4
      %s22 = int_to_ptr.vmem [resolvable:$true] %s21
      %27 = dma.hbm_to_vmem [thread:$0]  %s0, 256, %s22, [#allocation5], 128, 128, 8
    $region5: #{tpu_custom_call.1} parent=1 // pred_fallthru
      _
    // Predicated region
    $region6: #{tpu_custom_call.1} parent=1 // pred_check
      _
    $region7: #{tpu_custom_call.1} parent=1 // pred_check_branch
      %29 = sbr.rel (0) target = $region9
    $region8: #{tpu_custom_call.1} parent=1 // pred_region
      %s31 = ssub.s32 2048, 2048
      %32 = vsyncadd [#allocation8], %s31
      %s33 = sshll.u32 [#allocation7], 4
      %s34 = int_to_ptr.vmem [resolvable:$true] %s33
      %39 = dma.hbm_to_vmem [thread:$0]  %s1, 2048, %s34, [#allocation8], 128, 128, 8
    $region9: #{tpu_custom_call.1} parent=1 // pred_fallthru
      _
    // Predicated region
    $region10: #{tpu_custom_call.1} parent=1 // pred_check
      _
    $region11: #{tpu_custom_call.1} parent=1 // pred_check_branch
      %41 = sbr.rel (0) target = $region13
    $region12: #{tpu_custom_call.1} parent=1 // pred_region
      _
    $region13: #{tpu_custom_call.1} parent=1 // pred_fallthru
      _
    // Predicated region
    $region14: #{tpu_custom_call.1} parent=1 // pred_check
      _
    $region15: #{tpu_custom_call.1} parent=1 // pred_check_branch
      %43 = sbr.rel (0) target = $region17
    $region16: #{tpu_custom_call.1} parent=1 // pred_region
      %s45 = ssub.s32 2048, 2048
      %46 = vsyncadd [#allocation8], %s45
      %s47 = sshll.u32 [#allocation9], 4
      %s48 = int_to_ptr.vmem [resolvable:$true] %s47
      %53 = dma.hbm_to_vmem [thread:$0]  %s3, 2048, %s48, [#allocation8], 128, 128, 8
    $region17: #{tpu_custom_call.1} parent=1 // pred_fallthru
      _
    // Predicated region
    $region18: #{tpu_custom_call.1} parent=1 // pred_check
      _
    $region19: #{tpu_custom_call.1} parent=1 // pred_check_branch
      %55 = sbr.rel (0) target = $region21
    $region20: #{tpu_custom_call.1} parent=1 // pred_region
      _
    $region21: #{tpu_custom_call.1} parent=1 // pred_fallthru
      _
    // Predicated region
    $region22: #{tpu_custom_call.1} parent=1 // pred_check
      _
    $region23: #{tpu_custom_call.1} parent=1 // pred_check_branch
      %57 = sbr.rel (0) target = $region25
    $region24: #{tpu_custom_call.1} parent=1 // pred_region
      %58 = dma.done [#allocation5], 256
    $region25: #{tpu_custom_call.1} parent=1 // pred_fallthru
      _
    // Predicated region
    $region26: #{tpu_custom_call.1} parent=1 // pred_check
      _
    $region27: #{tpu_custom_call.1} parent=1 // pred_check_branch
      %60 = sbr.rel (0) target = $region29
    $region28: #{tpu_custom_call.1} parent=1 // pred_region
      %61 = dma.done [#allocation8], 2048
    $region29: #{tpu_custom_call.1} parent=1 // pred_fallthru
      _
    // Predicated region
    $region30: #{tpu_custom_call.1} parent=1 // pred_check
      _
    $region31: #{tpu_custom_call.1} parent=1 // pred_check_branch
      %63 = sbr.rel (0) target = $region33
    $region32: #{tpu_custom_call.1} parent=1 // pred_region
      %64 = dma.done [#allocation8], 2048
    $region33: #{tpu_custom_call.1} parent=1 // pred_fallthru
      _
    %p65 = scmp.eq.s32.totalorder 0, 0
    // Predicated region
    $region34: #{tpu_custom_call.1} parent=1 // pred_check
      %p66 = pneg %p65
    $region35: #{tpu_custom_call.1} parent=1 // pred_check_branch
      %68 = sbr.rel (%p66) target = $region37
    $region36: #{tpu_custom_call.1} parent=1 // pred_region
      %v69 = vld [vmem:[%s4] sm:$0x1]
      %v71 = vlaneseq
      %v72 = vshrl.u32 %v71, 7
      %v73 = vsub.s32 0, %v72
      %v74 = vrot.slane %v69, %v73
      %76 = vst [vmem:[#allocation2] sm:$0xff] %v74
      %77 = vst [vmem:[#allocation2 + $0x8] sm:$0xff] %v74
      %v78 = vld [vmem:[#allocation4] sm:$0xff]
      %v79 = vld [vmem:[#allocation4 + $0x8] sm:$0xff]
      %v80 = vsub.f32 %v78, %v74
      %v81 = vsub.f32 %v79, %v74
      %82 = vst [vmem:[#allocation3] sm:$0xff] %v80
      %83 = vst [vmem:[#allocation3 + $0x8] sm:$0xff] %v81
    $region37: #{tpu_custom_call.1} parent=1 // pred_fallthru
      _
    %v84 = vld [vmem:[#allocation3] sm:$0xff]
    %v85 = vld [vmem:[#allocation3 + $0x8] sm:$0xff]
    %v86 = vld [vmem:[#allocation7] sm:$0xff]
    %v87 = vld [vmem:[#allocation7 + $0x8] sm:$0xff]
    %v88 = vld [vmem:[#allocation7 + $0x10] sm:$0xff]
    %v89 = vld [vmem:[#allocation7 + $0x18] sm:$0xff]
    %v90 = vld [vmem:[#allocation7 + $0x20] sm:$0xff]
    %v91 = vld [vmem:[#allocation7 + $0x28] sm:$0xff]
    %v92 = vld [vmem:[#allocation7 + $0x30] sm:$0xff]
    %v93 = vld [vmem:[#allocation7 + $0x38] sm:$0xff]
    %v94 = vld [vmem:[#allocation7 + $0x40] sm:$0xff]
    %v95 = vld [vmem:[#allocation7 + $0x48] sm:$0xff]
    %v96 = vld [vmem:[#allocation7 + $0x50] sm:$0xff]
    %v97 = vld [vmem:[#allocation7 + $0x58] sm:$0xff]
    %v98 = vld [vmem:[#allocation7 + $0x60] sm:$0xff]
    %v99 = vld [vmem:[#allocation7 + $0x68] sm:$0xff]
    %v100 = vld [vmem:[#allocation7 + $0x70] sm:$0xff]
    %v101 = vld [vmem:[#allocation7 + $0x78] sm:$0xff]
    %v102 = vld [vmem:[%s2] sm:$0x1]
    %v104 = vlaneseq
    %v105 = vshrl.u32 %v104, 7
    %v106 = vsub.s32 0, %v105
    %v107 = vrot.slane %v102, %v106
    %109 = vmatprep.subr.mxu0 0.0
    %110 = vmatpush1.msra.mxu0 %v86
    %111 = vmatprep.subr.mxu0 0.0
    %112 = vmatpush1.msra.mxu0 %v87
    %113 = vmatprep.subr.mxu0 0.0
    %114 = vmatpush1.msra.mxu0 %v88
    %115 = vmatprep.subr.mxu0 0.0
    %116 = vmatpush1.msra.mxu0 %v89
    %117 = vmatprep.subr.mxu0 0.0
    %118 = vmatpush1.msra.mxu0 %v90
    %119 = vmatprep.subr.mxu0 0.0
    %120 = vmatpush1.msra.mxu0 %v91
    %121 = vmatprep.subr.mxu0 0.0
    %122 = vmatpush1.msra.mxu0 %v92
    %123 = vmatprep.subr.mxu0 0.0
    %124 = vmatpush1.msra.mxu0 %v93
    %125 = vmatprep.subr.mxu0 0.0
    %126 = vmatpush1.msra.mxu0 %v94
    %127 = vmatprep.subr.mxu0 0.0
    %128 = vmatpush1.msra.mxu0 %v95
    %129 = vmatprep.subr.mxu0 0.0
    %130 = vmatpush1.msra.mxu0 %v96
    %131 = vmatprep.subr.mxu0 0.0
    %132 = vmatpush1.msra.mxu0 %v97
    %133 = vmatprep.subr.mxu0 0.0
    %134 = vmatpush1.msra.mxu0 %v98
    %135 = vmatprep.subr.mxu0 0.0
    %136 = vmatpush1.msra.mxu0 %v99
    %137 = vmatprep.subr.mxu0 0.0
    %138 = vmatpush1.msra.mxu0 %v100
    %139 = vmatprep.subr.mxu0 0.0
    %140 = vmatpush1.msra.mxu0 %v101
    %141 = vmatprep.subr.mxu0 0.0
    %142 = vmatpush1.msra.mxu0 0.0
    %143 = vmatprep.subr.mxu0 0.0
    %144 = vmatpush1.msra.mxu0 0.0
    %145 = vmatprep.subr.mxu0 0.0
    %146 = vmatpush1.msra.mxu0 0.0
    %147 = vmatprep.subr.mxu0 0.0
    %148 = vmatpush1.msra.mxu0 0.0
    %149 = vmatprep.subr.mxu0 0.0
    %150 = vmatpush1.msra.mxu0 0.0
    %151 = vmatprep.subr.mxu0 0.0
    %152 = vmatpush1.msra.mxu0 0.0
    %153 = vmatprep.subr.mxu0 0.0
    %154 = vmatpush1.msra.mxu0 0.0
    %155 = vmatprep.subr.mxu0 0.0
    %156 = vmatpush1.msra.mxu0 0.0
    %157 = vmatprep.subr.mxu0 0.0
    %158 = vmatpush1.msra.mxu0 0.0
    %159 = vmatprep.subr.mxu0 0.0
    %160 = vmatpush1.msra.mxu0 0.0
    %161 = vmatprep.subr.mxu0 0.0
    %162 = vmatpush1.msra.mxu0 0.0
    %163 = vmatprep.subr.mxu0 0.0
    %164 = vmatpush1.msra.mxu0 0.0
    %165 = vmatprep.subr.mxu0 0.0
    %166 = vmatpush1.msra.mxu0 0.0
    %167 = vmatprep.subr.mxu0 0.0
    %168 = vmatpush1.msra.mxu0 0.0
    %169 = vmatprep.subr.mxu0 0.0
    %170 = vmatpush1.msra.mxu0 0.0
    %171 = vmatprep.subr.mxu0 0.0
    %172 = vmatpush1.msra.mxu0 0.0
    %173 = vmatprep.mubr.f32.mxu0 0.0
    %174 = vmatmul.mubr.f32.gmra.mrb[0].mxu0 %v84
    %v175 = vpop.f32.mrb[0].mxu0
    %v176 = vadd.f32 %v107, %v175
    %v177 = vpop.f32.mrb[0].mxu0
    %178 = vmatprep.mubr.f32.mxu0 0.0
    %179 = vmatmul.mubr.f32.gmra.mrb[0].mxu0 %v85
    %v180 = vpop.f32.mrb[0].mxu0
    %v181 = vadd.f32 %v107, %v180
    %v182 = vpop.f32.mrb[0].mxu0
    %183 = vdwg.mxu0
    %v184 = vmax.f32 %v176, 0.0
    %v185 = vmax.f32 %v181, 0.0
    %186 = vst [vmem:[#allocation11] sm:$0xff] %v184
    %187 = vst [vmem:[#allocation11 + $0x8] sm:$0xff] %v185
    %v188 = vld [vmem:[#allocation2] sm:$0xff]
    %v189 = vld [vmem:[#allocation2 + $0x8] sm:$0xff]
    %v190 = vld [vmem:[#allocation9] sm:$0xff]
    %v191 = vld [vmem:[#allocation9 + $0x8] sm:$0xff]
    %v192 = vld [vmem:[#allocation9 + $0x10] sm:$0xff]
    %v193 = vld [vmem:[#allocation9 + $0x18] sm:$0xff]
    %v194 = vld [vmem:[#allocation9 + $0x20] sm:$0xff]
    %v195 = vld [vmem:[#allocation9 + $0x28] sm:$0xff]
    %v196 = vld [vmem:[#allocation9 + $0x30] sm:$0xff]
    %v197 = vld [vmem:[#allocation9 + $0x38] sm:$0xff]
    %v198 = vld [vmem:[#allocation9 + $0x40] sm:$0xff]
    %v199 = vld [vmem:[#allocation9 + $0x48] sm:$0xff]
    %v200 = vld [vmem:[#allocation9 + $0x50] sm:$0xff]
    %v201 = vld [vmem:[#allocation9 + $0x58] sm:$0xff]
    %v202 = vld [vmem:[#allocation9 + $0x60] sm:$0xff]
    %v203 = vld [vmem:[#allocation9 + $0x68] sm:$0xff]
    %v204 = vld [vmem:[#allocation9 + $0x70] sm:$0xff]
    %v205 = vld [vmem:[#allocation9 + $0x78] sm:$0xff]
    %206 = vmatprep.subr.mxu0 0.0
    %207 = vmatpush1.msra.mxu0 %v190
    %208 = vmatprep.subr.mxu0 0.0
    %209 = vmatpush1.msra.mxu0 %v191
    %210 = vmatprep.subr.mxu0 0.0
    %211 = vmatpush1.msra.mxu0 %v192
    %212 = vmatprep.subr.mxu0 0.0
    %213 = vmatpush1.msra.mxu0 %v193
    %214 = vmatprep.subr.mxu0 0.0
    %215 = vmatpush1.msra.mxu0 %v194
    %216 = vmatprep.subr.mxu0 0.0
    %217 = vmatpush1.msra.mxu0 %v195
    %218 = vmatprep.subr.mxu0 0.0
    %219 = vmatpush1.msra.mxu0 %v196
    %220 = vmatprep.subr.mxu0 0.0
    %221 = vmatpush1.msra.mxu0 %v197
    %222 = vmatprep.subr.mxu0 0.0
    %223 = vmatpush1.msra.mxu0 %v198
    %224 = vmatprep.subr.mxu0 0.0
    %225 = vmatpush1.msra.mxu0 %v199
    %226 = vmatprep.subr.mxu0 0.0
    %227 = vmatpush1.msra.mxu0 %v200
    %228 = vmatprep.subr.mxu0 0.0
    %229 = vmatpush1.msra.mxu0 %v201
    %230 = vmatprep.subr.mxu0 0.0
    %231 = vmatpush1.msra.mxu0 %v202
    %232 = vmatprep.subr.mxu0 0.0
    %233 = vmatpush1.msra.mxu0 %v203
    %234 = vmatprep.subr.mxu0 0.0
    %235 = vmatpush1.msra.mxu0 %v204
    %236 = vmatprep.subr.mxu0 0.0
    %237 = vmatpush1.msra.mxu0 %v205
    %238 = vmatprep.subr.mxu0 0.0
    %239 = vmatpush1.msra.mxu0 0.0
    %240 = vmatprep.subr.mxu0 0.0
    %241 = vmatpush1.msra.mxu0 0.0
    %242 = vmatprep.subr.mxu0 0.0
    %243 = vmatpush1.msra.mxu0 0.0
    %244 = vmatprep.subr.mxu0 0.0
    %245 = vmatpush1.msra.mxu0 0.0
    %246 = vmatprep.subr.mxu0 0.0
    %247 = vmatpush1.msra.mxu0 0.0
    %248 = vmatprep.subr.mxu0 0.0
    %249 = vmatpush1.msra.mxu0 0.0
    %250 = vmatprep.subr.mxu0 0.0
    %251 = vmatpush1.msra.mxu0 0.0
    %252 = vmatprep.subr.mxu0 0.0
    %253 = vmatpush1.msra.mxu0 0.0
    %254 = vmatprep.subr.mxu0 0.0
    %255 = vmatpush1.msra.mxu0 0.0
    %256 = vmatprep.subr.mxu0 0.0
    %257 = vmatpush1.msra.mxu0 0.0
    %258 = vmatprep.subr.mxu0 0.0
    %259 = vmatpush1.msra.mxu0 0.0
    %260 = vmatprep.subr.mxu0 0.0
    %261 = vmatpush1.msra.mxu0 0.0
    %262 = vmatprep.subr.mxu0 0.0
    %263 = vmatpush1.msra.mxu0 0.0
    %264 = vmatprep.subr.mxu0 0.0
    %265 = vmatpush1.msra.mxu0 0.0
    %266 = vmatprep.subr.mxu0 0.0
    %267 = vmatpush1.msra.mxu0 0.0
    %268 = vmatprep.subr.mxu0 0.0
    %269 = vmatpush1.msra.mxu0 0.0
    %270 = vmatprep.mubr.f32.mxu0 0.0
    %271 = vmatmul.mubr.f32.gmra.mrb[0].mxu0 %v184
    %v272 = vpop.f32.mrb[0].mxu0
    %v273 = vadd.f32 0.0, %v272
    %v274 = vpop.f32.mrb[0].mxu0
    %275 = vmatprep.mubr.f32.mxu0 0.0
    %276 = vmatmul.mubr.f32.gmra.mrb[0].mxu0 %v185
    %v277 = vpop.f32.mrb[0].mxu0
    %v278 = vadd.f32 0.0, %v277
    %v279 = vpop.f32.mrb[0].mxu0
    %280 = vdwg.mxu0
    %v281 = vadd.f32 %v188, %v273
    %v282 = vadd.f32 %v189, %v278
    %283 = vst [vmem:[#allocation2] sm:$0xff] %v281
    %284 = vst [vmem:[#allocation2 + $0x8] sm:$0xff] %v282
    // Predicated region
    $region38: #{tpu_custom_call.1} parent=1 // pred_check
      %p285 = pneg %p65
    $region39: #{tpu_custom_call.1} parent=1 // pred_check_branch
      %287 = sbr.rel (%p285) target = $region41
    $region40: #{tpu_custom_call.1} parent=1 // pred_region
      %v288 = vld [vmem:[#allocation2] sm:$0xff]
      %v289 = vld [vmem:[#allocation2 + $0x8] sm:$0xff]
      %290 = vst [vmem:[#allocation10] sm:$0xff] %v288
      %291 = vst [vmem:[#allocation10 + $0x8] sm:$0xff] %v289
    $region41: #{tpu_custom_call.1} parent=1 // pred_fallthru
      _
    // Predicated region
    $region42: #{tpu_custom_call.1} parent=1 // pred_check
      _
    $region43: #{tpu_custom_call.1} parent=1 // pred_check_branch
      %293 = sbr.rel (0) target = $region45
    $region44: #{tpu_custom_call.1} parent=1 // pred_region
      %s295 = ssub.s32 256, 256
      %296 = vsyncadd [#allocation6], %s295
      %s297 = sshll.u32 [#allocation10], 4
      %s298 = int_to_ptr.vmem [resolvable:$true] %s297
      %303 = dma.vmem_to_hbm [thread:$0]  %s298, 256, %s5, [#allocation6], 128, 128, 8
    $region45: #{tpu_custom_call.1} parent=1 // pred_fallthru
      _
    // Predicated region
    $region46: #{tpu_custom_call.1} parent=1 // pred_check
      _
    $region47: #{tpu_custom_call.1} parent=1 // pred_check_branch
      %305 = sbr.rel (0) target = $region49
    $region48: #{tpu_custom_call.1} parent=1 // pred_region
      %s307 = ssub.s32 256, 256
      %308 = vsyncadd [#allocation12], %s307
      %s309 = sshll.u32 [#allocation11], 4
      %s310 = int_to_ptr.vmem [resolvable:$true] %s309
      %315 = dma.vmem_to_hbm [thread:$0]  %s310, 256, %s6, [#allocation12], 128, 128, 8
    $region49: #{tpu_custom_call.1} parent=1 // pred_fallthru
      _
    // Predicated region
    $region50: #{tpu_custom_call.1} parent=1 // pred_check
      _
    $region51: #{tpu_custom_call.1} parent=1 // pred_check_branch
      %317 = sbr.rel (0) target = $region53
    $region52: #{tpu_custom_call.1} parent=1 // pred_region
      %318 = dma.done [#allocation6], 256
    $region53: #{tpu_custom_call.1} parent=1 // pred_fallthru
      _
    // Predicated region
    $region54: #{tpu_custom_call.1} parent=1 // pred_check
      _
    $region55: #{tpu_custom_call.1} parent=1 // pred_check_branch
      %320 = sbr.rel (0) target = $region57
    $region56: #{tpu_custom_call.1} parent=1 // pred_region
      %321 = dma.done [#allocation12], 256
    $region57: #{tpu_custom_call.1} parent=1 // pred_fallthru
      _
    %322 = vsyncpa [#allocation5], 1
    %323 = vsyncpa [#allocation8], 1
    %324 = vsyncpa [#allocation6], 1
    %325 = vsyncpa [#allocation12], 1

</llo_original>
